<compile_context>
chip_gen: v6e
topology: v6e:2x2x1
jax: 0.10.0
libtpu: 0.0.40
codegen_flags: <defaults>
</compile_context>

<pallas_src>
import functools

import jax
import jax.numpy as jnp
from jax import lax
from jax.experimental import pallas as pl
from jax.experimental.pallas import tpu as pltpu


# -----------------------------------------------------------------------------
# Kernels
# -----------------------------------------------------------------------------

def _cbn_fused_kernel(x_ref, p_ref, out_ref, stats_ref, *,
                      eps, momentum, inv_l, bessel, n, unroll):
    """Fused stats + normalize for one channel tile (whole spatial extent).

    x_ref    : (N, tc, HW) input tile (NCHW view, channels second-minor)
    p_ref    : (tc, 4)     packed per-channel params [weight, bias, run_mean, run_var]
    out_ref  : (N, tc, HW) normalized output tile
    stats_ref: (tc, 2)     packed updated running stats [new_mean, new_var]
    """
    tc, hw = x_ref.shape[1], x_ref.shape[2]

    # --- single-pass per-channel sums, f32 accumulation, no full f32 tile copy
    def stat_body(i, carry):
        s, ss = carry
        xf = x_ref[i].astype(jnp.float32)               # (tc, HW)
        return s + xf, ss + xf * xf

    zeros = jnp.zeros((tc, hw), jnp.float32)
    s, ss = lax.fori_loop(0, n, stat_body, (zeros, zeros), unroll=unroll)
    s1 = jnp.sum(s, axis=1, keepdims=True)              # (tc, 1) lane reduce (XLU)
    ss1 = jnp.sum(ss, axis=1, keepdims=True)             # (tc, 1)

    mu = s1 * inv_l
    # unbiased variance (torch.var default); clamp E[x^2]-mu^2 against f32 cancellation
    sigma2 = jnp.maximum(ss1 * inv_l - mu * mu, 0.0) * bessel

    p = p_ref[...].astype(jnp.float32)                  # (tc, 4)
    w, b = p[:, 0:1], p[:, 1:2]
    rm, rv = p[:, 2:3], p[:, 3:4]

    # out_p=False path of the reference:  y / (sqrt(sigma2) + eps)
    # (eps intentionally added to the std, NOT the variance — do not "fix".)
    inv = pl.reciprocal(jnp.sqrt(sigma2) + eps, approx=False)
    scale = w * inv                                      # (tc, 1)
    shift = b - mu * scale                               # (tc, 1)

    # --- apply pass: per-channel FMA, re-reading x per batch slice
    def apply_body(i, c):
        xf = x_ref[i].astype(jnp.float32)
        out_ref[i] = (xf * scale + shift).astype(out_ref.dtype)
        return c

    lax.fori_loop(0, n, apply_body, 0, unroll=unroll)

    # running-stats update (side effect in the PyTorch module; returned here)
    stats_ref[:, 0:1] = (1.0 - momentum) * rm + momentum * mu
    stats_ref[:, 1:2] = (1.0 - momentum) * rv + momentum * sigma2


def _cbn_stats_kernel(x_ref, p_ref, stats_ref, ab_ref, s_acc, ss_acc, *,
                      eps, momentum, inv_l, bessel, n, unroll):
    """Stats-only kernel for the large-spatial split path.

    Grid = (channel tiles, HW tiles); HW axis is a reduction ("arbitrary").
    Accumulates per-channel sum / sum-of-squares in VMEM scratch, finalizes on
    the last HW step writing packed running stats and packed (scale, shift).
    """
    h = pl.program_id(1)

    @pl.when(h == 0)
    def _():
        s_acc[...] = jnp.zeros_like(s_acc)
        ss_acc[...] = jnp.zeros_like(ss_acc)

    def stat_body(i, carry):
        s, ss = carry
        xf = x_ref[i].astype(jnp.float32)               # (tc, thw)
        return s + xf, ss + xf * xf

    zeros = jnp.zeros(x_ref.shape[1:], jnp.float32)
    s, ss = lax.fori_loop(0, n, stat_body, (zeros, zeros), unroll=unroll)
    s_acc[...] += jnp.sum(s, axis=1, keepdims=True)
    ss_acc[...] += jnp.sum(ss, axis=1, keepdims=True)

    @pl.when(h == pl.num_programs(1) - 1)
    def _():
        p = p_ref[...].astype(jnp.float32)
        w, b = p[:, 0:1], p[:, 1:2]
        rm, rv = p[:, 2:3], p[:, 3:4]

        mu = s_acc[...] * inv_l
        sigma2 = jnp.maximum(ss_acc[...] * inv_l - mu * mu, 0.0) * bessel
        inv = pl.reciprocal(jnp.sqrt(sigma2) + eps, approx=False)
        scale = w * inv
        shift = b - mu * scale

        stats_ref[:, 0:1] = (1.0 - momentum) * rm + momentum * mu
        stats_ref[:, 1:2] = (1.0 - momentum) * rv + momentum * sigma2
        ab_ref[:, 0:1] = scale
        ab_ref[:, 1:2] = shift


def _cbn_apply_kernel(x_ref, ab_ref, out_ref, *, n, unroll):
    """Apply kernel for the split path: out = x * scale + shift (per channel)."""
    ab = ab_ref[...]
    scale = ab[:, 0:1]
    shift = ab[:, 1:2]

    def apply_body(i, c):
        xf = x_ref[i].astype(jnp.float32)
        out_ref[i] = (xf * scale + shift).astype(out_ref.dtype)
        return c

    lax.fori_loop(0, n, apply_body, 0, unroll=unroll)


# -----------------------------------------------------------------------------
# Tiling helpers
# -----------------------------------------------------------------------------

def _vmem_budget():
    """Generation-aware (vmem_limit_bytes, per-step tile budget)."""
    cap = None
    try:
        info = pltpu.get_tpu_info()
        cap = getattr(info, "vmem_capacity_bytes", None)
    except Exception:
        cap = None
    if not cap or cap <= 0:
        cap = 64 * 1024 * 1024          # conservative default (v7x per-core)
    vmem_limit = int(0.80 * cap)        # ~51 MiB on v7x, ~102 MiB on v5e/v6e
    tile_budget = int(0.45 * vmem_limit)
    return vmem_limit, tile_budget


def _divisors(n):
    return [d for d in range(1, n + 1) if n % d == 0]


def _pick_channel_tile(C, N, HW, in_itemsize, out_itemsize, budget_bytes, sub):
    """Largest channel tile (multiple of `sub` dividing C, or C itself) fitting budget.

    Accounting per channel per grid step:
      - x input + output blocks, each double-buffered by the BlockSpec pipeline
      - ~24 bytes/elt of f32 loop accumulators / temporaries (s, ss, xf, xf*xf)
    Returns None when even `sub` channels don't fit (-> split path).
    Also caps the tile so the "parallel" channel grid has >= 2 (even) steps when
    channels allow, so v7x's two TensorCores both get work.
    """
    per_channel = N * HW * 2 * (in_itemsize + out_itemsize) + HW * 24 + 64
    cap = budget_bytes // per_channel
    if cap < 1:
        return None

    cands = [d for d in range(sub, C + 1, sub) if C % d == 0]
    if C not in cands:
        cands.append(C)
    cands = sorted(d for d in cands if d <= cap)
    if not cands:
        return None

    if C // cands[-1] >= 2:
        return cands[-1]                       # grid already >= 2 steps; take biggest

    # Biggest candidate is the whole C -> try to split for megacore (>= 2 steps).
    multi = [d for d in cands if C // d >= 2]
    if multi:
        even = [d for d in multi if (C // d) % 2 == 0]
        pool = even if even else multi
        return pool[-1]
    return cands[-1]


def _pick_split_tiles(C, N, HW, itemsize, budget_bytes, sub):
    """(thw, tc2) for the stats+apply split path (large-spatial fallback)."""
    ch_divs = _divisors(C)
    pref = [d for d in ch_divs if d % sub == 0]
    tc2 = min(pref) if pref else C             # keep blocks (8,128)-legal

    hw_divs = _divisors(HW)
    lane = [d for d in hw_divs if d % 128 == 0]
    cands = sorted(lane, reverse=True) if lane else [HW]

    def step_bytes(thw):
        # apply step: in + out blocks double-buffered, plus f32 temporaries
        return N * tc2 * thw * 4 * itemsize + tc2 * thw * 24

    for thw in cands:
        if step_bytes(thw) <= budget_bytes:
            return thw, tc2
    return cands[-1], tc2


# -----------------------------------------------------------------------------
# Wrapper
# -----------------------------------------------------------------------------

def cbatchnorm2d_forward(x, weight, bias, running_mean, running_var,
                         eps=1e-5, momentum=0.1, *, donate_x=False,
                         vmem_budget_bytes=None):
    """Forward of CBatchNorm2d (training, buffer_num=0, track_running_stats=True).

    x: (N, C, H, W). Returns (y_nchw, new_running_mean, new_running_var).
    """
    N, C, H, W = x.shape
    HW = H * W
    L = N * HW

    # Free view of NCHW — no HBM transpose; BlockSpec tiles channels directly.
    x3 = x.reshape(N, C, HW)

    # Pack the six tiny per-channel tensors into one input / one output.
    params = jnp.stack([weight.astype(jnp.float32),
                        bias.astype(jnp.float32),
                        running_mean.astype(jnp.float32),
                        running_var.astype(jnp.float32)], axis=1)   # (C, 4)

    itemsize = jnp.dtype(x.dtype).itemsize
    sub = max(8, 8 * (4 // max(itemsize, 1)))   # 8 f32, 16 bf16/f16, 32 int8
    vmem_limit, auto_budget = _vmem_budget()
    budget = int(vmem_budget_bytes) if vmem_budget_bytes is not None else auto_budget

    consts = dict(eps=float(eps), momentum=float(momentum),
                  inv_l=1.0 / float(L),
                  bessel=float(L) / float(max(L - 1, 1)),   # torch.var unbiased
                  n=N, unroll=bool(N <= 8))
    alias = {0: 0} if donate_x else {}

    tc = _pick_channel_tile(C, N, HW, itemsize, itemsize, budget, sub)

    if tc is not None:
        # ------------------------------ fused single-pass path ----------------
        grid = (C // tc,)
        out, stats = pl.pallas_call(
            functools.partial(_cbn_fused_kernel, **consts),
            grid=grid,
            in_specs=[pl.BlockSpec((N, tc, HW), lambda i: (0, i, 0)),
                      pl.BlockSpec((tc, 4), lambda i: (i, 0))],
            out_specs=[pl.BlockSpec((N, tc, HW), lambda i: (0, i, 0)),
                       pl.BlockSpec((tc, 2), lambda i: (i, 0))],
            out_shape=[jax.ShapeDtypeStruct((N, C, HW), x.dtype),
                       jax.ShapeDtypeStruct((C, 2), jnp.float32)],
            compiler_params=pltpu.CompilerParams(
                dimension_semantics=("parallel",),
                vmem_limit_bytes=vmem_limit),
            input_output_aliases=alias,
        )(x3, params)
        return out.reshape(N, C, H, W), stats[:, 0], stats[:, 1]

    # ---------------------------- large-spatial split path --------------------
    thw, tc2 = _pick_split_tiles(C, N, HW, itemsize, budget, sub)
    grid = (C // tc2, HW // thw)

    stats, ab = pl.pallas_call(
        functools.partial(_cbn_stats_kernel, **consts),
        grid=grid,
        in_specs=[pl.BlockSpec((N, tc2, thw), lambda c, h: (0, c, h)),
                  pl.BlockSpec((tc2, 4), lambda c, h: (c, 0))],
        out_specs=[pl.BlockSpec((tc2, 2), lambda c, h: (c, 0)),
                   pl.BlockSpec((tc2, 2), lambda c, h: (c, 0))],
        out_shape=[jax.ShapeDtypeStruct((C, 2), jnp.float32),
                   jax.ShapeDtypeStruct((C, 2), jnp.float32)],
        scratch_shapes=[pltpu.VMEM((tc2, 1), jnp.float32),
                        pltpu.VMEM((tc2, 1), jnp.float32)],
        compiler_params=pltpu.CompilerParams(
            dimension_semantics=("parallel", "arbitrary"),
            vmem_limit_bytes=vmem_limit),
    )(x3, params)

    out = pl.pallas_call(
        functools.partial(_cbn_apply_kernel, n=N, unroll=bool(N <= 8)),
        grid=grid,
        in_specs=[pl.BlockSpec((N, tc2, thw), lambda c, h: (0, c, h)),
                  pl.BlockSpec((tc2, 2), lambda c, h: (c, 0))],
        out_specs=pl.BlockSpec((N, tc2, thw), lambda c, h: (0, c, h)),
        out_shape=jax.ShapeDtypeStruct((N, C, HW), x.dtype),
        compiler_params=pltpu.CompilerParams(
            dimension_semantics=("parallel", "parallel"),
            vmem_limit_bytes=vmem_limit),
        input_output_aliases=alias,
    )(x3, ab)

    return out.reshape(N, C, H, W), stats[:, 0], stats[:, 1]


# -----------------------------------------------------------------------------
# Reference + test
# -----------------------------------------------------------------------------

def _reference(x, weight, bias, running_mean, running_var, eps=1e-5, momentum=0.1):
    """Pure-JAX reference mirroring the PyTorch forward (training, buffer_num=0)."""
    N, C, H, W = x.shape
    y = jnp.transpose(x, (1, 0, 2, 3)).reshape(C, -1)
    L = y.shape[1]
    mu = jnp.mean(y, axis=1)
    sigma2 = jnp.var(y, axis=1) * (L / (L - 1))        # unbiased, like torch.var
    new_rm = (1 - momentum) * running_mean + momentum * mu
    new_rv = (1 - momentum) * running_var + momentum * sigma2
    y = y - mu[:, None]
    y = y / (jnp.sqrt(sigma2)[:, None] + eps)          # out_p=False
    y = weight[:, None] * y + bias[:, None]
    return jnp.transpose(y.reshape(C, N, H, W), (1, 0, 2, 3)), new_rm, new_rv


if __name__ == "__main__":
    key = jax.random.PRNGKey(0)
    k_x, k_w = jax.random.split(key)

    N, C, H, W = 2, 4, 16, 16
    x = jax.random.normal(k_x, (N, C, H, W), dtype=jnp.float32)

    # deterministic param init matching reset_parameters():
    #   weight ~ uniform_(), bias = 0, running_mean = 0, running_var = 1
    weight = jax.random.uniform(k_w, (C,), dtype=jnp.float32)
    bias = jnp.zeros((C,), dtype=jnp.float32)
    running_mean = jnp.zeros((C,), dtype=jnp.float32)
    running_var = jnp.ones((C,), dtype=jnp.float32)

    y_ref, rm_ref, rv_ref = _reference(x, weight, bias, running_mean, running_var)

    # Fast path: fused single-pass kernel.
    y_out, new_rm, new_rv = cbatchnorm2d_forward(
        x, weight, bias, running_mean, running_var)
    jax.block_until_ready((y_out, new_rm, new_rv))
    assert y_out.shape == (N, C, H, W)
    assert jnp.allclose(y_out, y_ref, atol=1e-4, rtol=1e-4)
    assert jnp.allclose(new_rm, rm_ref, atol=1e-5, rtol=1e-5)
    assert jnp.allclose(new_rv, rv_ref, atol=1e-5, rtol=1e-5)

    # Large-spatial fallback: force the stats+apply split path with a tiny budget.
    y2, rm2, rv2 = cbatchnorm2d_forward(
        x, weight, bias, running_mean, running_var, vmem_budget_bytes=4096)
    jax.block_until_ready((y2, rm2, rv2))
    assert jnp.allclose(y2, y_ref, atol=1e-4, rtol=1e-4)
    assert jnp.allclose(rm2, rm_ref, atol=1e-5, rtol=1e-5)
    assert jnp.allclose(rv2, rv_ref, atol=1e-5, rtol=1e-5)

    print("KERNEL_OK")
</pallas_src>

<mosaic_0001>
module attributes {stable_mosaic.version = 11 : i64} {
  func.func @_cbn_fused_kernel(%arg0: i32, %arg1: memref<2x4x256xf32, #tpu.memory_space<vmem>>, %arg2: memref<4x4xf32, #tpu.memory_space<vmem>>, %arg3: memref<2x4x256xf32, #tpu.memory_space<vmem>>, %arg4: memref<4x2xf32, #tpu.memory_space<vmem>>) attributes {dimension_semantics = [#tpu.dimension_semantics<parallel>], iteration_bounds = array<i64: 1>, scalar_prefetch = 0 : i64, scratch_operands = 0 : i64, tpu.core_type = #tpu.core_type<tc>, window_params = [{transform_indices = @transform_0, window_bounds = array<i64: 2, 4, 256>}, {transform_indices = @transform_1, window_bounds = array<i64: 4, 4>}, {transform_indices = @transform_2, window_bounds = array<i64: 2, 4, 256>}, {transform_indices = @transform_3, window_bounds = array<i64: 4, 2>}]} {
    %cst = arith.constant 0.000000e+00 : f32
    %0 = vector.broadcast %cst : f32 to vector<4x256xf32>
    %c0_i32 = arith.constant 0 : i32
    %1 = arith.index_cast %c0_i32 : i32 to index
    %c0 = arith.constant 0 : index
    %c0_0 = arith.constant 0 : index
    %2 = vector.load %arg1[%1, %c0, %c0_0] : memref<2x4x256xf32, #tpu.memory_space<vmem>>, vector<1x4x256xf32>
    %3 = vector.shape_cast %2 : vector<1x4x256xf32> to vector<4x256xf32>
    %4 = arith.addf %0, %3 : vector<4x256xf32>
    %5 = arith.mulf %3, %3 : vector<4x256xf32>
    %6 = arith.addf %0, %5 : vector<4x256xf32>
    %c1_i32 = arith.constant 1 : i32
    %7 = arith.index_cast %c1_i32 : i32 to index
    %c0_1 = arith.constant 0 : index
    %c0_2 = arith.constant 0 : index
    %8 = vector.load %arg1[%7, %c0_1, %c0_2] : memref<2x4x256xf32, #tpu.memory_space<vmem>>, vector<1x4x256xf32>
    %9 = vector.shape_cast %8 : vector<1x4x256xf32> to vector<4x256xf32>
    %10 = arith.addf %4, %9 : vector<4x256xf32>
    %11 = arith.mulf %9, %9 : vector<4x256xf32>
    %12 = arith.addf %6, %11 : vector<4x256xf32>
    %c2_i32 = arith.constant 2 : i32
    %cst_3 = arith.constant dense<0.000000e+00> : vector<4xf32>
    %13 = vector.multi_reduction <add>, %10, %cst_3 [1] : vector<4x256xf32> to vector<4xf32>
    %14 = vector.shape_cast %13 : vector<4xf32> to vector<4x1xf32>
    %cst_4 = arith.constant dense<0.000000e+00> : vector<4xf32>
    %15 = vector.multi_reduction <add>, %12, %cst_4 [1] : vector<4x256xf32> to vector<4xf32>
    %16 = vector.shape_cast %15 : vector<4xf32> to vector<4x1xf32>
    %cst_5 = arith.constant 0.001953125 : f32
    %17 = vector.broadcast %cst_5 : f32 to vector<4x1xf32>
    %18 = arith.mulf %14, %17 : vector<4x1xf32>
    %cst_6 = arith.constant 0.001953125 : f32
    %19 = vector.broadcast %cst_6 : f32 to vector<4x1xf32>
    %20 = arith.mulf %16, %19 : vector<4x1xf32>
    %21 = arith.mulf %18, %18 : vector<4x1xf32>
    %22 = arith.subf %20, %21 : vector<4x1xf32>
    %cst_7 = arith.constant 0.000000e+00 : f32
    %23 = vector.broadcast %cst_7 : f32 to vector<4x1xf32>
    %24 = arith.maximumf %22, %23 : vector<4x1xf32>
    %cst_8 = arith.constant 1.00195694 : f32
    %25 = vector.broadcast %cst_8 : f32 to vector<4x1xf32>
    %26 = arith.mulf %24, %25 : vector<4x1xf32>
    %c0_9 = arith.constant 0 : index
    %c0_10 = arith.constant 0 : index
    %27 = vector.load %arg2[%c0_9, %c0_10] : memref<4x4xf32, #tpu.memory_space<vmem>>, vector<4x4xf32>
    %28 = vector.extract_strided_slice %27 {offsets = [0, 0], sizes = [4, 1], strides = [1, 1]} : vector<4x4xf32> to vector<4x1xf32>
    %29 = vector.extract_strided_slice %27 {offsets = [0, 1], sizes = [4, 1], strides = [1, 1]} : vector<4x4xf32> to vector<4x1xf32>
    %30 = vector.extract_strided_slice %27 {offsets = [0, 2], sizes = [4, 1], strides = [1, 1]} : vector<4x4xf32> to vector<4x1xf32>
    %31 = vector.extract_strided_slice %27 {offsets = [0, 3], sizes = [4, 1], strides = [1, 1]} : vector<4x4xf32> to vector<4x1xf32>
    %32 = math.sqrt %26 : vector<4x1xf32>
    %cst_11 = arith.constant 9.99999974E-6 : f32
    %33 = vector.broadcast %cst_11 : f32 to vector<4x1xf32>
    %34 = arith.addf %32, %33 : vector<4x1xf32>
    %35 = tpu.reciprocal %34 : vector<4x1xf32> -> vector<4x1xf32>
    %36 = arith.mulf %28, %35 : vector<4x1xf32>
    %37 = arith.mulf %18, %36 : vector<4x1xf32>
    %38 = arith.subf %29, %37 : vector<4x1xf32>
    %c0_i32_12 = arith.constant 0 : i32
    %39 = arith.index_cast %c0_i32_12 : i32 to index
    %c0_13 = arith.constant 0 : index
    %c0_14 = arith.constant 0 : index
    %40 = vector.load %arg1[%39, %c0_13, %c0_14] : memref<2x4x256xf32, #tpu.memory_space<vmem>>, vector<1x4x256xf32>
    %41 = vector.shape_cast %40 : vector<1x4x256xf32> to vector<4x256xf32>
    %42 = vector.broadcast %36 : vector<4x1xf32> to vector<4x256xf32>
    %43 = arith.mulf %41, %42 : vector<4x256xf32>
    %44 = vector.broadcast %38 : vector<4x1xf32> to vector<4x256xf32>
    %45 = arith.addf %43, %44 : vector<4x256xf32>
    %46 = arith.index_cast %c0_i32_12 : i32 to index
    %c0_15 = arith.constant 0 : index
    %c0_16 = arith.constant 0 : index
    %47 = vector.load %arg3[%46, %c0_15, %c0_16] : memref<2x4x256xf32, #tpu.memory_space<vmem>>, vector<1x4x256xf32>
    %48 = vector.shape_cast %47 : vector<1x4x256xf32> to vector<4x256xf32>
    %49 = vector.shape_cast %45 : vector<4x256xf32> to vector<1x4x256xf32>
    tpu.vector_store %arg3[%46, %c0_15, %c0_16], %49 {strides = array<i32>} : memref<2x4x256xf32, #tpu.memory_space<vmem>>, vector<1x4x256xf32>,
    %c1_i32_17 = arith.constant 1 : i32
    %50 = arith.index_cast %c1_i32_17 : i32 to index
    %c0_18 = arith.constant 0 : index
    %c0_19 = arith.constant 0 : index
    %51 = vector.load %arg1[%50, %c0_18, %c0_19] : memref<2x4x256xf32, #tpu.memory_space<vmem>>, vector<1x4x256xf32>
    %52 = vector.shape_cast %51 : vector<1x4x256xf32> to vector<4x256xf32>
    %53 = vector.broadcast %36 : vector<4x1xf32> to vector<4x256xf32>
    %54 = arith.mulf %52, %53 : vector<4x256xf32>
    %55 = vector.broadcast %38 : vector<4x1xf32> to vector<4x256xf32>
    %56 = arith.addf %54, %55 : vector<4x256xf32>
    %57 = arith.index_cast %c1_i32_17 : i32 to index
    %c0_20 = arith.constant 0 : index
    %c0_21 = arith.constant 0 : index
    %58 = vector.load %arg3[%57, %c0_20, %c0_21] : memref<2x4x256xf32, #tpu.memory_space<vmem>>, vector<1x4x256xf32>
    %59 = vector.shape_cast %58 : vector<1x4x256xf32> to vector<4x256xf32>
    %60 = vector.shape_cast %56 : vector<4x256xf32> to vector<1x4x256xf32>
    tpu.vector_store %arg3[%57, %c0_20, %c0_21], %60 {strides = array<i32>} : memref<2x4x256xf32, #tpu.memory_space<vmem>>, vector<1x4x256xf32>,
    %c2_i32_22 = arith.constant 2 : i32
    %cst_23 = arith.constant 0.899999976 : f32
    %61 = vector.broadcast %cst_23 : f32 to vector<4x1xf32>
    %62 = arith.mulf %61, %30 : vector<4x1xf32>
    %cst_24 = arith.constant 1.000000e-01 : f32
    %63 = vector.broadcast %cst_24 : f32 to vector<4x1xf32>
    %64 = arith.mulf %63, %18 : vector<4x1xf32>
    %65 = arith.addf %62, %64 : vector<4x1xf32>
    %c0_25 = arith.constant 0 : index
    %c0_26 = arith.constant 0 : index
    %66 = vector.load %arg4[%c0_25, %c0_26] : memref<4x2xf32, #tpu.memory_space<vmem>>, vector<4x1xf32>
    tpu.vector_store %arg4[%c0_25, %c0_26], %65 {strides = array<i32>} : memref<4x2xf32, #tpu.memory_space<vmem>>, vector<4x1xf32>,
    %cst_27 = arith.constant 0.899999976 : f32
    %67 = vector.broadcast %cst_27 : f32 to vector<4x1xf32>
    %68 = arith.mulf %67, %31 : vector<4x1xf32>
    %cst_28 = arith.constant 1.000000e-01 : f32
    %69 = vector.broadcast %cst_28 : f32 to vector<4x1xf32>
    %70 = arith.mulf %69, %26 : vector<4x1xf32>
    %71 = arith.addf %68, %70 : vector<4x1xf32>
    %c0_29 = arith.constant 0 : index
    %c1 = arith.constant 1 : index
    %72 = vector.load %arg4[%c0_29, %c1] : memref<4x2xf32, #tpu.memory_space<vmem>>, vector<4x1xf32>
    tpu.vector_store %arg4[%c0_29, %c1], %71 {strides = array<i32>} : memref<4x2xf32, #tpu.memory_space<vmem>>, vector<4x1xf32>,
    return
  }
  func.func @transform_0(%arg0: i32) -> (i32, i32, i32) {
    %c0_i32 = arith.constant 0 : i32
    %c0_i32_0 = arith.constant 0 : i32
    %c0_i32_1 = arith.constant 0 : i32
    return %c0_i32, %arg0, %c0_i32_0 : i32, i32, i32
  }
  func.func @transform_1(%arg0: i32) -> (i32, i32) {
    %c0_i32 = arith.constant 0 : i32
    %c0_i32_0 = arith.constant 0 : i32
    return %arg0, %c0_i32 : i32, i32
  }
  func.func @transform_2(%arg0: i32) -> (i32, i32, i32) {
    %c0_i32 = arith.constant 0 : i32
    %c0_i32_0 = arith.constant 0 : i32
    %c0_i32_1 = arith.constant 0 : i32
    return %c0_i32, %arg0, %c0_i32_0 : i32, i32, i32
  }
  func.func @transform_3(%arg0: i32) -> (i32, i32) {
    %c0_i32 = arith.constant 0 : i32
    %c0_i32_0 = arith.constant 0 : i32
    return %arg0, %c0_i32 : i32, i32
  }
}

</mosaic_0001>

<llo_original>
// kernel: tpu_custom_call.1
$region0: #{tpu_custom_call.1}
  #allocation0 [shape = 'u32[]', space=smem, size = 0x4, offset = 0x4, fixed_abs, tag = 'smem constant byte address 0x4 - core index']
  #allocation1 [shape = 'u32[144,128]{1,0:T(1,128)}', space=vmem, size = 0x12000, scoped, tag = 'internal scratch']
  %s0 = inlined_call_operand.hbm [shape: f32[2,4,256], index: 0, kind: input, shape index: {}]
  %s1 = inlined_call_operand.hbm [shape: f32[4,4], index: 1, kind: input, shape index: {}]
  %s2 = inlined_call_operand.hbm [shape: f32[2,4,256], index: 2, kind: output, shape index: {0}]
  %s3 = inlined_call_operand.vmem [shape: f32[4,2], index: 3, kind: output, shape index: {1}]
  %4 = xla_tuple %s2, %s3
  %s5 = sld [smem:[#allocation0]]
  $region34: #{tpu_custom_call.1} parent=0
    _
  %s7 = ssub.s32 1, %s5
  %s8 = scalar_select 0, %s7, %s5
  $region1: #{tpu_custom_call.1} parent=0
    #allocation2 [shape = 'u8[8192]{0}', space=vmem, size = 0x2000, scoped, tag = 'input window, operand 0, single buffered']
    #allocation3 [shape = 's32[1]{0}', space=sflag, size = 0x4, scoped, tag = 'scoped memory for tpu_custom_call.1']
    #allocation4 [shape = 's32[1]{0}', space=sflag, size = 0x4, scoped, tag = 'scoped memory for tpu_custom_call.1']
    #allocation5 [shape = 'u8[2048]{0}', space=vmem, size = 0x800, scoped, tag = 'input window, operand 1, single buffered']
    #allocation6 [shape = 's32[1]{0}', space=sflag, size = 0x4, scoped, tag = 'scoped memory for tpu_custom_call.1']
    #allocation7 [shape = 'u8[8192]{0}', space=vmem, size = 0x2000, scoped, tag = 'output window, operand 0, single buffered']
    %9 = vsyncpa [#allocation3], 0
    %10 = vsyncpa [#allocation6], 0
    %11 = vsyncpa [#allocation4], 0
    // Predicated region
    $region2: #{tpu_custom_call.1} parent=1 // pred_check
      _
    $region3: #{tpu_custom_call.1} parent=1 // pred_check_branch
      %13 = sbr.rel (0) target = $region5
    $region4: #{tpu_custom_call.1} parent=1 // pred_region
      %s15 = ssub.s32 256, 256
      %16 = vsyncadd [#allocation3], %s15
      %s17 = sshll.u32 [#allocation2], 4
      %s18 = int_to_ptr.vmem [resolvable:$true] %s17
      %23 = dma.hbm_to_vmem [thread:$0]  %s0, 256, %s18, [#allocation3], 128, 128, 8
    $region5: #{tpu_custom_call.1} parent=1 // pred_fallthru
      _
    // Predicated region
    $region6: #{tpu_custom_call.1} parent=1 // pred_check
      _
    $region7: #{tpu_custom_call.1} parent=1 // pred_check_branch
      %25 = sbr.rel (0) target = $region9
    $region8: #{tpu_custom_call.1} parent=1 // pred_region
      %s27 = ssub.s32 64, 64
      %28 = vsyncadd [#allocation6], %s27
      %s30 = sshll.u32 [#allocation5], 4
      %s31 = int_to_ptr.vmem [resolvable:$true] %s30
      %33 = dma.hbm_to_vmem [thread:$0]  %s1, 64, %s31, [#allocation6]
    $region9: #{tpu_custom_call.1} parent=1 // pred_fallthru
      _
    // Predicated region
    $region10: #{tpu_custom_call.1} parent=1 // pred_check
      _
    $region11: #{tpu_custom_call.1} parent=1 // pred_check_branch
      %35 = sbr.rel (0) target = $region13
    $region12: #{tpu_custom_call.1} parent=1 // pred_region
      %36 = dma.done [#allocation3], 256
    $region13: #{tpu_custom_call.1} parent=1 // pred_fallthru
      _
    // Predicated region
    $region14: #{tpu_custom_call.1} parent=1 // pred_check
      _
    $region15: #{tpu_custom_call.1} parent=1 // pred_check_branch
      %38 = sbr.rel (0) target = $region17
    $region16: #{tpu_custom_call.1} parent=1 // pred_region
      %39 = dma.done [#allocation6], 64
    $region17: #{tpu_custom_call.1} parent=1 // pred_fallthru
      _
    %v40 = vld [vmem:[#allocation2] sm:$0xff]
    %v41 = vadd.f32 %v40, 0.0
    %v42 = vmul.f32 %v40, %v40
    %v43 = vadd.f32 %v42, 0.0
    %s44 = scalar_lea.vmem [#allocation2], 8
    %v45 = vld [vmem:[%s44] sm:$0xff]
    %v46 = vadd.f32 %v41, %v45
    %v47 = vmul.f32 %v45, %v45
    %v48 = vadd.f32 %v43, %v47
    %v50 = vcombine.high %v46, %v46
    %vm52 = vcmask 1043456
    %v53 = vsel %vm52, %v46, 0.0
    %v54 = vsel %vm52, %v50, 0.0
    %v55 = vadd.f32 %v53, %v54
    %56 = vadd.xlane.f32.xlu0 %v55
    %v57 = vpop.xlane.xlu0 %56
    %v59 = vcombine.high %v48, %v48
    %v61 = vsel %vm52, %v48, 0.0
    %v62 = vsel %vm52, %v59, 0.0
    %v63 = vadd.f32 %v61, %v62
    %64 = vadd.xlane.f32.xlu0 %v63
    %v65 = vpop.xlane.xlu0 %64
    %v66 = vmul.f32 %v57, 0.001953125
    %v67 = vmul.f32 %v65, 0.001953125
    %v68 = vmul.f32 %v66, %v66
    %v69 = vsub.f32 %v67, %v68
    %v70 = vmax.f32 %v69, 0.0
    %v71 = vmul.f32 %v70, 1.0019569
    %v72 = vld [vmem:[#allocation5] sm:$0xf]
    %v73 = vrsqrt.pop %v71
    %v74 = vmul.f32 %v71, %v73
    %vm75 = vcmp.eq.f32.partialorder %v71, inf
    %v76 = vsel %vm75, %v71, %v74
    %vm77 = vcmp.eq.f32.partialorder %v71, 0.0
    %v78 = vand.u32 %v71, 2147483648
    %v79 = vsel %vm77, %v78, %v76
    %v80 = vadd.f32 %v79, 1e-05
    %v81 = vrcp.pop %v80
    %v82 = vmul.f32 %v72, %v81
    %v83 = vmul.f32 %v66, %v82
    %85 = vrot.lane.b32.xlu0 %v83, 1
    %v86 = vpop.permute.xlu0 %85
    %v88 = vsub.f32 %v72, %v86
    %90 = vset.pattern.permute.xlu0 0
    %91 = vperm.xlu0 %90, %v82
    %v92 = vpop.permute.xlu0 %91
    %v94 = vunpack.c.l.s4 839922192
    %v95 = vunpack.c.0.s8 %v94
    %v96 = vlaneseq
    %v97 = vshrl.u32 %v96, 7
    %v98 = vsub.s32 %v95, %v97
    %v99 = vrot.slane %v92, %v98
    %v101 = vmul.f32 %v40, %v99
    %103 = vset.pattern.permute.xlu0 1
    %104 = vperm.xlu0 %103, %v88
    %v105 = vpop.permute.xlu0 %104
    %v107 = vunpack.c.l.s4 839922192
    %v108 = vunpack.c.0.s8 %v107
    %v109 = vlaneseq
    %v110 = vshrl.u32 %v109, 7
    %v111 = vsub.s32 %v108, %v110
    %v112 = vrot.slane %v105, %v111
    %v114 = vadd.f32 %v101, %v112
    %115 = vst [vmem:[#allocation7] sm:$0xff] %v114
    %v116 = vld [vmem:[%s44] sm:$0xff]
    %v117 = vmul.f32 %v116, %v99
    %v118 = vadd.f32 %v117, %v112
    %s119 = scalar_lea.vmem [#allocation7], 8
    %120 = vst [vmem:[%s119] sm:$0xff] %v118
    %v121 = vmul.f32 %v72, 0.9
    %v122 = vmul.f32 %v66, 0.1
    %v123 = vadd.f32 %v121, %v122
    %125 = vrot.lane.b32.xlu0 %v123, 126
    %v126 = vpop.permute.xlu0 %125
    %vm128 = vcmask 3072
    %129 = vst.msk [vmem:[%s3] sm:$0xf] %vm128, %v126
    %v130 = vmul.f32 %v71, 0.1
    %v131 = vadd.f32 %v121, %v130
    %133 = vrot.lane.b32.xlu0 %v131, 126
    %v134 = vpop.permute.xlu0 %133
    %vm136 = vcmask 11272
    %137 = vst.msk [vmem:[%s3] sm:$0xf] %vm136, %v134
    // Predicated region
    $region18: #{tpu_custom_call.1} parent=1 // pred_check
      _
    $region19: #{tpu_custom_call.1} parent=1 // pred_check_branch
      %139 = sbr.rel (0) target = $region21
    $region20: #{tpu_custom_call.1} parent=1 // pred_region
      %s141 = ssub.s32 256, 256
      %142 = vsyncadd [#allocation4], %s141
      %s143 = sshll.u32 [#allocation7], 4
      %s144 = int_to_ptr.vmem [resolvable:$true] %s143
      %149 = dma.vmem_to_hbm [thread:$0]  %s144, 256, %s2, [#allocation4], 128, 128, 8
    $region21: #{tpu_custom_call.1} parent=1 // pred_fallthru
      _
    // Predicated region
    $region22: #{tpu_custom_call.1} parent=1 // pred_check
      _
    $region23: #{tpu_custom_call.1} parent=1 // pred_check_branch
      %151 = sbr.rel (0) target = $region25
    $region24: #{tpu_custom_call.1} parent=1 // pred_region
      _
    $region25: #{tpu_custom_call.1} parent=1 // pred_fallthru
      _
    // Predicated region
    $region26: #{tpu_custom_call.1} parent=1 // pred_check
      _
    $region27: #{tpu_custom_call.1} parent=1 // pred_check_branch
      %153 = sbr.rel (0) target = $region29
    $region28: #{tpu_custom_call.1} parent=1 // pred_region
      %154 = dma.done [#allocation4], 256
    $region29: #{tpu_custom_call.1} parent=1 // pred_fallthru
      _
    // Predicated region
    $region30: #{tpu_custom_call.1} parent=1 // pred_check
      _
    $region31: #{tpu_custom_call.1} parent=1 // pred_check_branch
      %156 = sbr.rel (0) target = $region33
    $region32: #{tpu_custom_call.1} parent=1 // pred_region
      _
    $region33: #{tpu_custom_call.1} parent=1 // pred_fallthru
      _
    %157 = vsyncpa [#allocation3], 1
    %158 = vsyncpa [#allocation6], 1
    %159 = vsyncpa [#allocation4], 1

</llo_original>
